<compile_context>
chip_gen: v7x
topology: tpu7x:2x2x1
jax: 0.10.0
libtpu: 0.0.40
codegen_flags: <defaults>
</compile_context>

<pallas_src>
import jax
import jax.numpy as jnp
from jax.experimental import pallas as pl
from jax.experimental.pallas import tpu as pltpu


def _dense_mlp_kernel(x_ref, w1_ref, c1_ref, w2_ref, c2_ref, w3_ref, c3_ref,
                      o_ref):
    """Fused 3-layer MLP on one batch tile: (matmul -> +shift -> relu) x 3."""
    x = x_ref[...]  # [TILE_B, K] bf16

    h = jnp.dot(x, w1_ref[...], preferred_element_type=jnp.float32)
    h = jnp.maximum(h + c1_ref[...], 0.0)

    h = jnp.dot(h.astype(w2_ref.dtype), w2_ref[...],
                preferred_element_type=jnp.float32)
    h = jnp.maximum(h + c2_ref[...], 0.0)

    h = jnp.dot(h.astype(w3_ref.dtype), w3_ref[...],
                preferred_element_type=jnp.float32)
    h = jnp.maximum(h + c3_ref[...], 0.0)

    o_ref[...] = h.astype(o_ref.dtype)


def _round_up(n, m):
    return ((n + m - 1) // m) * m


def prepare_params(params, eps=1e-5, compute_dtype=jnp.bfloat16):
    """One-time fold of eval-mode BatchNorm (+ linear bias) into weights/shift.

    Done ONCE at parameter-load time so the fold is amortized across forward
    calls (doing it per-call in the wrapper is a known anti-pattern).
    """

    def fold(w, b, g, be, m, v):
        scale = g / jnp.sqrt(v + eps)                     # [N]
        shift = be - m * scale                            # [N]
        w_folded = (w * scale[None, :]).astype(compute_dtype)   # [K, N]
        c = (b * scale + shift).astype(jnp.float32)[None, :]    # [1, N]
        return w_folded, c

    w1, c1 = fold(params["w1"], params["b1"], params["g1"], params["be1"],
                  params["m1"], params["v1"])
    w2, c2 = fold(params["w2"], params["b2"], params["g2"], params["be2"],
                  params["m2"], params["v2"])
    w3, c3 = fold(params["w3"], params["b3"], params["g3"], params["be3"],
                  params["m3"], params["v3"])
    return dict(w1=w1, c1=c1, w2=w2, c2=c2, w3=w3, c3=c3)


def dense_neural_network(x, prep, tile_b=512):
    """Forward pass of DenseNeuralNetwork via one batch-tiled pallas_call.

    x: [B, input_dim] float32. prep: output of prepare_params().
    Returns [B, output_dim] float32.
    """
    B, K = x.shape
    N1 = prep["w1"].shape[1]
    N2 = prep["w2"].shape[1]
    N3 = prep["w3"].shape[1]
    compute_dtype = prep["w1"].dtype

    x = x.astype(compute_dtype)

    # Pick a batch tile: multiple of 8 sublanes, never bigger than (rounded) B.
    tile_b = min(tile_b, _round_up(B, 8))
    b_padded = _round_up(B, tile_b)
    if b_padded != B:
        x = jnp.pad(x, ((0, b_padded - B), (0, 0)))
    grid = (b_padded // tile_b,)

    flops = 2 * b_padded * (K * N1 + N1 * N2 + N2 * N3)
    bytes_accessed = int(
        b_padded * K * 2                      # x (bf16)
        + (K * N1 + N1 * N2 + N2 * N3) * 2    # weights (bf16)
        + (N1 + N2 + N3) * 4                  # shifts (f32)
        + b_padded * N3 * 4                   # output (f32)
    )

    out = pl.pallas_call(
        _dense_mlp_kernel,
        out_shape=jax.ShapeDtypeStruct((b_padded, N3), jnp.float32),
        grid=grid,
        in_specs=[
            # x: tiled over batch.
            pl.BlockSpec((tile_b, K), lambda i: (i, 0)),
            # Weights / shifts: constant index_map -> VMEM-resident across tiles.
            pl.BlockSpec((K, N1), lambda i: (0, 0)),
            pl.BlockSpec((1, N1), lambda i: (0, 0)),
            pl.BlockSpec((N1, N2), lambda i: (0, 0)),
            pl.BlockSpec((1, N2), lambda i: (0, 0)),
            pl.BlockSpec((N2, N3), lambda i: (0, 0)),
            pl.BlockSpec((1, N3), lambda i: (0, 0)),
        ],
        out_specs=pl.BlockSpec((tile_b, N3), lambda i: (i, 0)),
        compiler_params=pltpu.CompilerParams(
            dimension_semantics=("parallel",),
        ),
        cost_estimate=pl.CostEstimate(
            flops=flops, transcendentals=0, bytes_accessed=bytes_accessed),
    )(x, prep["w1"], prep["c1"], prep["w2"], prep["c2"], prep["w3"], prep["c3"])

    return out[:B] if b_padded != B else out


def init_params(key, input_dim, output_dim=128):
    """Deterministic synthetic parameters matching the PyTorch module shapes."""
    ks = jax.random.split(key, 12)

    def lin(kw, kb, fan_in, fan_out):
        lim = 1.0 / jnp.sqrt(fan_in)
        w = jax.random.uniform(kw, (fan_in, fan_out), jnp.float32, -lim, lim)
        b = jax.random.uniform(kb, (fan_out,), jnp.float32, -lim, lim)
        return w, b

    w1, b1 = lin(ks[0], ks[1], input_dim, 256)
    w2, b2 = lin(ks[2], ks[3], 256, 256)
    w3, b3 = lin(ks[4], ks[5], 256, output_dim)

    def bn(km, kv, n):
        gamma = jnp.ones((n,), jnp.float32)
        beta = jnp.zeros((n,), jnp.float32)
        mean = 0.1 * jax.random.normal(km, (n,), jnp.float32)
        var = jnp.abs(1.0 + 0.1 * jax.random.normal(kv, (n,), jnp.float32))
        return gamma, beta, mean, var

    g1, be1, m1, v1 = bn(ks[6], ks[7], 256)
    g2, be2, m2, v2 = bn(ks[8], ks[9], 256)
    g3, be3, m3, v3 = bn(ks[10], ks[11], output_dim)

    return dict(
        w1=w1, b1=b1, g1=g1, be1=be1, m1=m1, v1=v1,
        w2=w2, b2=b2, g2=g2, be2=be2, m2=m2, v2=v2,
        w3=w3, b3=b3, g3=g3, be3=be3, m3=m3, v3=v3,
    )


def reference_forward(x, params):
    """Pure-JAX f32 reference matching the PyTorch eval-mode forward."""
    eps = 1e-5

    def layer(h, w, b, g, be, m, v):
        h = h @ w + b
        h = (h - m) / jnp.sqrt(v + eps) * g + be
        return jnp.maximum(h, 0.0)

    h = layer(x, params["w1"], params["b1"], params["g1"], params["be1"],
              params["m1"], params["v1"])
    h = layer(h, params["w2"], params["b2"], params["g2"], params["be2"],
              params["m2"], params["v2"])
    h = layer(h, params["w3"], params["b3"], params["g3"], params["be3"],
              params["m3"], params["v3"])
    return h


if __name__ == "__main__":
    key = jax.random.PRNGKey(0)
    k_x, k_p = jax.random.split(key)

    batch, input_dim, output_dim = 20, 64, 128
    x = jax.random.normal(k_x, (batch, input_dim), jnp.float32)
    params = init_params(k_p, input_dim, output_dim)

    prep = prepare_params(params)           # one-time BN fold + bf16 cast
    # tile_b=8 at this toy batch exercises the multi-tile grid and the
    # pad-and-slice path; production callers keep the default tile_b=512.
    out = dense_neural_network(x, prep, tile_b=8)
    out = jax.block_until_ready(out)

    ref = reference_forward(x, params)
    assert out.shape == (batch, output_dim)
    # bf16 matmul inputs (f32 accumulation) => loosen tolerance vs f32 reference.
    assert jnp.allclose(out, ref, atol=3e-2, rtol=3e-2), "mismatch vs reference"

    print("KERNEL_OK")
</pallas_src>

<mosaic_0001>
module attributes {stable_mosaic.version = 11 : i64} {
  func.func @_dense_mlp_kernel(%arg0: i32, %arg1: memref<8x64xbf16, #tpu.memory_space<vmem>>, %arg2: memref<64x256xbf16, #tpu.memory_space<vmem>>, %arg3: memref<1x256xf32, #tpu.memory_space<vmem>>, %arg4: memref<256x256xbf16, #tpu.memory_space<vmem>>, %arg5: memref<1x256xf32, #tpu.memory_space<vmem>>, %arg6: memref<256x128xbf16, #tpu.memory_space<vmem>>, %arg7: memref<1x128xf32, #tpu.memory_space<vmem>>, %arg8: memref<8x128xf32, #tpu.memory_space<vmem>>) attributes {dimension_semantics = [#tpu.dimension_semantics<parallel>], iteration_bounds = array<i64: 3>, scalar_prefetch = 0 : i64, scratch_operands = 0 : i64, tpu.core_type = #tpu.core_type<tc>, window_params = [{transform_indices = @transform_0, window_bounds = array<i64: 8, 64>}, {pipeline_mode = #tpu.pipeline_mode<synchronous>, transform_indices = @transform_1, window_bounds = array<i64: 64, 256>}, {pipeline_mode = #tpu.pipeline_mode<synchronous>, transform_indices = @transform_2, window_bounds = array<i64: 1, 256>}, {pipeline_mode = #tpu.pipeline_mode<synchronous>, transform_indices = @transform_3, window_bounds = array<i64: 256, 256>}, {pipeline_mode = #tpu.pipeline_mode<synchronous>, transform_indices = @transform_4, window_bounds = array<i64: 1, 256>}, {pipeline_mode = #tpu.pipeline_mode<synchronous>, transform_indices = @transform_5, window_bounds = array<i64: 256, 128>}, {pipeline_mode = #tpu.pipeline_mode<synchronous>, transform_indices = @transform_6, window_bounds = array<i64: 1, 128>}, {transform_indices = @transform_7, window_bounds = array<i64: 8, 128>}]} {
    %c0 = arith.constant 0 : index
    %c0_0 = arith.constant 0 : index
    %0 = vector.load %arg1[%c0, %c0_0] : memref<8x64xbf16, #tpu.memory_space<vmem>>, vector<8x64xbf16>
    %c0_1 = arith.constant 0 : index
    %c0_2 = arith.constant 0 : index
    %1 = vector.load %arg2[%c0_1, %c0_2] : memref<64x256xbf16, #tpu.memory_space<vmem>>, vector<64x256xbf16>
    %cst = arith.constant dense<0.000000e+00> : vector<8x256xf32>
    %2 = tpu.matmul %0, %1, %cst {dimension_numbers = #tpu.dot_dimension_numbers<[1], [0], [0], [1], [0, 0, 1, 1], [], []>} : vector<8x64xbf16>, vector<64x256xbf16>, vector<8x256xf32> -> vector<8x256xf32>
    %c0_3 = arith.constant 0 : index
    %c0_4 = arith.constant 0 : index
    %3 = vector.load %arg3[%c0_3, %c0_4] : memref<1x256xf32, #tpu.memory_space<vmem>>, vector<1x256xf32>
    %4 = vector.broadcast %3 : vector<1x256xf32> to vector<8x256xf32>
    %5 = arith.addf %2, %4 : vector<8x256xf32>
    %cst_5 = arith.constant 0.000000e+00 : f32
    %6 = vector.broadcast %cst_5 : f32 to vector<8x256xf32>
    %7 = arith.maximumf %5, %6 : vector<8x256xf32>
    %8 = arith.truncf %7 : vector<8x256xf32> to vector<8x256xbf16>
    %c0_6 = arith.constant 0 : index
    %c0_7 = arith.constant 0 : index
    %9 = vector.load %arg4[%c0_6, %c0_7] : memref<256x256xbf16, #tpu.memory_space<vmem>>, vector<256x256xbf16>
    %cst_8 = arith.constant dense<0.000000e+00> : vector<8x256xf32>
    %10 = tpu.matmul %8, %9, %cst_8 {dimension_numbers = #tpu.dot_dimension_numbers<[1], [0], [0], [1], [0, 0, 1, 1], [], []>} : vector<8x256xbf16>, vector<256x256xbf16>, vector<8x256xf32> -> vector<8x256xf32>
    %c0_9 = arith.constant 0 : index
    %c0_10 = arith.constant 0 : index
    %11 = vector.load %arg5[%c0_9, %c0_10] : memref<1x256xf32, #tpu.memory_space<vmem>>, vector<1x256xf32>
    %12 = vector.broadcast %11 : vector<1x256xf32> to vector<8x256xf32>
    %13 = arith.addf %10, %12 : vector<8x256xf32>
    %cst_11 = arith.constant 0.000000e+00 : f32
    %14 = vector.broadcast %cst_11 : f32 to vector<8x256xf32>
    %15 = arith.maximumf %13, %14 : vector<8x256xf32>
    %16 = arith.truncf %15 : vector<8x256xf32> to vector<8x256xbf16>
    %c0_12 = arith.constant 0 : index
    %c0_13 = arith.constant 0 : index
    %17 = vector.load %arg6[%c0_12, %c0_13] : memref<256x128xbf16, #tpu.memory_space<vmem>>, vector<256x128xbf16>
    %cst_14 = arith.constant dense<0.000000e+00> : vector<8x128xf32>
    %18 = tpu.matmul %16, %17, %cst_14 {dimension_numbers = #tpu.dot_dimension_numbers<[1], [0], [0], [1], [0, 0, 1, 1], [], []>} : vector<8x256xbf16>, vector<256x128xbf16>, vector<8x128xf32> -> vector<8x128xf32>
    %c0_15 = arith.constant 0 : index
    %c0_16 = arith.constant 0 : index
    %19 = vector.load %arg7[%c0_15, %c0_16] : memref<1x128xf32, #tpu.memory_space<vmem>>, vector<1x128xf32>
    %20 = vector.broadcast %19 : vector<1x128xf32> to vector<8x128xf32>
    %21 = arith.addf %18, %20 : vector<8x128xf32>
    %cst_17 = arith.constant 0.000000e+00 : f32
    %22 = vector.broadcast %cst_17 : f32 to vector<8x128xf32>
    %23 = arith.maximumf %21, %22 : vector<8x128xf32>
    %c0_18 = arith.constant 0 : index
    %c0_19 = arith.constant 0 : index
    %24 = vector.load %arg8[%c0_18, %c0_19] : memref<8x128xf32, #tpu.memory_space<vmem>>, vector<8x128xf32>
    tpu.vector_store %arg8[%c0_18, %c0_19], %23 {strides = array<i32>} : memref<8x128xf32, #tpu.memory_space<vmem>>, vector<8x128xf32>,
    return
  }
  func.func @transform_0(%arg0: i32) -> (i32, i32) {
    %c0_i32 = arith.constant 0 : i32
    %c0_i32_0 = arith.constant 0 : i32
    return %arg0, %c0_i32 : i32, i32
  }
  func.func @transform_1(%arg0: i32) -> (i32, i32) {
    %c0_i32 = arith.constant 0 : i32
    %c0_i32_0 = arith.constant 0 : i32
    %c0_i32_1 = arith.constant 0 : i32
    return %c0_i32, %c0_i32_0 : i32, i32
  }
  func.func @transform_2(%arg0: i32) -> (i32, i32) {
    %c0_i32 = arith.constant 0 : i32
    %c0_i32_0 = arith.constant 0 : i32
    %c0_i32_1 = arith.constant 0 : i32
    return %c0_i32, %c0_i32_0 : i32, i32
  }
  func.func @transform_3(%arg0: i32) -> (i32, i32) {
    %c0_i32 = arith.constant 0 : i32
    %c0_i32_0 = arith.constant 0 : i32
    %c0_i32_1 = arith.constant 0 : i32
    return %c0_i32, %c0_i32_0 : i32, i32
  }
  func.func @transform_4(%arg0: i32) -> (i32, i32) {
    %c0_i32 = arith.constant 0 : i32
    %c0_i32_0 = arith.constant 0 : i32
    %c0_i32_1 = arith.constant 0 : i32
    return %c0_i32, %c0_i32_0 : i32, i32
  }
  func.func @transform_5(%arg0: i32) -> (i32, i32) {
    %c0_i32 = arith.constant 0 : i32
    %c0_i32_0 = arith.constant 0 : i32
    %c0_i32_1 = arith.constant 0 : i32
    return %c0_i32, %c0_i32_0 : i32, i32
  }
  func.func @transform_6(%arg0: i32) -> (i32, i32) {
    %c0_i32 = arith.constant 0 : i32
    %c0_i32_0 = arith.constant 0 : i32
    %c0_i32_1 = arith.constant 0 : i32
    return %c0_i32, %c0_i32_0 : i32, i32
  }
  func.func @transform_7(%arg0: i32) -> (i32, i32) {
    %c0_i32 = arith.constant 0 : i32
    %c0_i32_0 = arith.constant 0 : i32
    return %arg0, %c0_i32 : i32, i32
  }
}

</mosaic_0001>

<llo_original>
// kernel: tpu_custom_call.1
$region0: #{tpu_custom_call.1}
  #allocation0 [shape = 'u32[]', space=smem, size = 0x4, offset = 0x4, fixed_abs, tag = 'smem constant byte address 0x4 - core index']
  #allocation1 [shape = 'u32[144,128]{1,0:T(1,128)}', space=vmem, size = 0x12000, scoped, tag = 'internal scratch']
  %s0 = inlined_call_operand.hbm [shape: bf16[24,64], index: 0, kind: input, shape index: {}]
  %s1 = inlined_call_operand.hbm [shape: bf16[64,256], index: 1, kind: input, shape index: {}]
  %s2 = inlined_call_operand.vmem [shape: f32[1,256], index: 2, kind: input, shape index: {}]
  %s3 = inlined_call_operand.hbm [shape: bf16[256,256], index: 3, kind: input, shape index: {}]
  %s4 = inlined_call_operand.vmem [shape: f32[1,256], index: 4, kind: input, shape index: {}]
  %s5 = inlined_call_operand.hbm [shape: bf16[256,128], index: 5, kind: input, shape index: {}]
  %s6 = inlined_call_operand.vmem [shape: f32[1,128], index: 6, kind: input, shape index: {}]
  %s7 = inlined_call_operand.hbm [shape: f32[24,128], index: 7, kind: output, shape index: {}]
  %s8 = sld [smem:[#allocation0]]
  $region77: #{tpu_custom_call.1} parent=0
    _
  %s10 = ssub.s32 1, %s8
  %s11 = scalar_select 0, %s10, %s8
  $region1: #{tpu_custom_call.1} parent=0
    #allocation2 [shape = 'u8[4096]{0}', space=vmem, size = 0x1000, scoped, tag = 'input window, operand 0']
    #allocation3 [shape = 's32[2]{0}', space=sflag, size = 0x8, scoped, tag = 'scoped memory for tpu_custom_call.1']
    #allocation4 [shape = 's32[2]{0}', space=sflag, size = 0x8, scoped, tag = 'scoped memory for tpu_custom_call.1']
    #allocation5 [shape = 'u8[32768]{0}', space=vmem, size = 0x8000, scoped, tag = 'input window, operand 1, single buffered']
    #allocation6 [shape = 's32[1]{0}', space=sflag, size = 0x4, scoped, tag = 'scoped memory for tpu_custom_call.1']
    #allocation7 [shape = 'u8[131072]{0}', space=vmem, size = 0x20000, scoped, tag = 'input window, operand 3, single buffered']
    #allocation8 [shape = 'u8[65536]{0}', space=vmem, size = 0x10000, scoped, tag = 'input window, operand 5, single buffered']
    #allocation9 [shape = 's32[1]{0}', space=sflag, size = 0x4, scoped, tag = 'scoped memory for tpu_custom_call.1']
    #allocation10 [shape = 'u8[8192]{0}', space=vmem, size = 0x2000, scoped, tag = 'output window, operand 0']
    %12 = vsyncpa [#allocation3], 0
    %s13 = scalar_lea.sflag [#allocation3], 1
    %14 = vsyncpa %s13, 0
    %15 = vsyncpa [#allocation6], 0
    %16 = vsyncpa [#allocation9], 0
    %17 = vsyncpa [#allocation4], 0
    %s18 = scalar_lea.sflag [#allocation4], 1
    %19 = vsyncpa %s18, 0
    loop: start=0, step=1, limit=5
    $region2: #{tpu_custom_call.1} parent=1 // loop_pre_header
      _
    $region3: #{tpu_custom_call.1} parent=1 // loop_header
      %s21 = sphi 0, %s25
      %p22 = scmp.ge.s32.totalorder %s21, 5
      %s31 = sphi 0, %s33
      %s34 = sphi 0, %s31
      %s35 = sphi 0, %s34
      %s51 = sphi 0, %s35
      %s55 = sphi 0, %s55
      %s57 = sphi 0, %s55
      %s58 = sphi 0, %s57
      %s72 = sphi 0, %s58
      %s76 = sphi 0, %s76
      %s78 = sphi 0, %s76
      %s79 = sphi 0, %s78
      %s93 = sphi 0, %s79
      %s97 = sphi 0, %s97
      %s99 = sphi 0, %s97
      %s100 = sphi 0, %s99
      %s114 = sphi 0, %s100
      %s118 = sphi 0, %s118
      %s120 = sphi 0, %s118
      %s121 = sphi 0, %s120
      %s135 = sphi 0, %s121
      %s139 = sphi 0, %s139
      %s141 = sphi 0, %s139
      %s142 = sphi 0, %s141
      %s156 = sphi 0, %s142
      %s160 = sphi 0, %s160
      %s162 = sphi 0, %s160
      %s163 = sphi 0, %s162
      %s177 = sphi 0, %s163
      %s183 = sphi 0, %s185
      %s186 = sphi 0, %s183
      %s187 = sphi 0, %s186
      %s203 = sphi 0, %s187
    $region4: #{tpu_custom_call.1} parent=1 // loop_header_branch
      %24 = sbr.rel (%p22) target = $region8
    $region5: #{tpu_custom_call.1} parent=1 // loop_body
      %s26 = ssub.s32 %s21, 1
      %s27 = ssub.s32 %s21, 2
      %s28 = sadd.s32 %s21, 1
      %s29 = ssub.s32 %s21, %s28
      %p30 = scmp.eq.s32.totalorder %s29, 0
      %s32 = sadd.s32 %s31, 1
      %s33 = scalar_select %p30, %s31, %s32
      %p36 = pneg %p30
      %p37 = scmp.eq.s32.totalorder %s21, 2
      %p38 = por %p36, %p37
      %p39 = scmp.ne.s32.totalorder %s31, %s34
      %p40 = scmp.eq.s32.totalorder %s21, 0
      %p41 = por %p39, %p40
      %p42 = scmp.ne.s32.totalorder %s31, %s34
      %p43 = scmp.eq.s32.totalorder %s26, 2
      %p44 = por %p42, %p43
      %p45 = scmp.ne.s32.totalorder %s34, %s35
      %p46 = scmp.eq.s32.totalorder %s26, 0
      %p47 = por %p45, %p46
      %p48 = scmp.ne.s32.totalorder %s34, %s35
      %p49 = scmp.eq.s32.totalorder %s27, 2
      %p50 = por %p48, %p49
      %p52 = scmp.ne.s32.totalorder %s35, %s51
      %p53 = scmp.eq.s32.totalorder %s27, 0
      %p54 = por %p52, %p53
      %s56 = sadd.s32 %s55, 1
      %p59 = scmp.eq.s32.totalorder %s21, 2
      %p60 = scmp.ne.s32.totalorder %s55, %s57
      %p61 = scmp.eq.s32.totalorder %s21, 0
      %p62 = por %p60, %p61
      %p63 = scmp.ne.s32.totalorder %s55, %s57
      %p64 = scmp.eq.s32.totalorder %s26, 2
      %p65 = por %p63, %p64
      %p66 = scmp.ne.s32.totalorder %s57, %s58
      %p67 = scmp.eq.s32.totalorder %s26, 0
      %p68 = por %p66, %p67
      %p69 = scmp.ne.s32.totalorder %s57, %s58
      %p70 = scmp.eq.s32.totalorder %s27, 2
      %p71 = por %p69, %p70
      %p73 = scmp.ne.s32.totalorder %s58, %s72
      %p74 = scmp.eq.s32.totalorder %s27, 0
      %p75 = por %p73, %p74
      %s77 = sadd.s32 %s76, 1
      %p80 = scmp.eq.s32.totalorder %s21, 2
      %p81 = scmp.ne.s32.totalorder %s76, %s78
      %p82 = scmp.eq.s32.totalorder %s21, 0
      %p83 = por %p81, %p82
      %p84 = scmp.ne.s32.totalorder %s76, %s78
      %p85 = scmp.eq.s32.totalorder %s26, 2
      %p86 = por %p84, %p85
      %p87 = scmp.ne.s32.totalorder %s78, %s79
      %p88 = scmp.eq.s32.totalorder %s26, 0
      %p89 = por %p87, %p88
      %p90 = scmp.ne.s32.totalorder %s78, %s79
      %p91 = scmp.eq.s32.totalorder %s27, 2
      %p92 = por %p90, %p91
      %p94 = scmp.ne.s32.totalorder %s79, %s93
      %p95 = scmp.eq.s32.totalorder %s27, 0
      %p96 = por %p94, %p95
      %s98 = sadd.s32 %s97, 1
      %p101 = scmp.eq.s32.totalorder %s21, 2
      %p102 = scmp.ne.s32.totalorder %s97, %s99
      %p103 = scmp.eq.s32.totalorder %s21, 0
      %p104 = por %p102, %p103
      %p105 = scmp.ne.s32.totalorder %s97, %s99
      %p106 = scmp.eq.s32.totalorder %s26, 2
      %p107 = por %p105, %p106
      %p108 = scmp.ne.s32.totalorder %s99, %s100
      %p109 = scmp.eq.s32.totalorder %s26, 0
      %p110 = por %p108, %p109
      %p111 = scmp.ne.s32.totalorder %s99, %s100
      %p112 = scmp.eq.s32.totalorder %s27, 2
      %p113 = por %p111, %p112
      %p115 = scmp.ne.s32.totalorder %s100, %s114
      %p116 = scmp.eq.s32.totalorder %s27, 0
      %p117 = por %p115, %p116
      %s119 = sadd.s32 %s118, 1
      %p122 = scmp.eq.s32.totalorder %s21, 2
      %p123 = scmp.ne.s32.totalorder %s118, %s120
      %p124 = scmp.eq.s32.totalorder %s21, 0
      %p125 = por %p123, %p124
      %p126 = scmp.ne.s32.totalorder %s118, %s120
      %p127 = scmp.eq.s32.totalorder %s26, 2
      %p128 = por %p126, %p127
      %p129 = scmp.ne.s32.totalorder %s120, %s121
      %p130 = scmp.eq.s32.totalorder %s26, 0
      %p131 = por %p129, %p130
      %p132 = scmp.ne.s32.totalorder %s120, %s121
      %p133 = scmp.eq.s32.totalorder %s27, 2
      %p134 = por %p132, %p133
      %p136 = scmp.ne.s32.totalorder %s121, %s135
      %p137 = scmp.eq.s32.totalorder %s27, 0
      %p138 = por %p136, %p137
      %s140 = sadd.s32 %s139, 1
      %p143 = scmp.eq.s32.totalorder %s21, 2
      %p144 = scmp.ne.s32.totalorder %s139, %s141
      %p145 = scmp.eq.s32.totalorder %s21, 0
      %p146 = por %p144, %p145
      %p147 = scmp.ne.s32.totalorder %s139, %s141
      %p148 = scmp.eq.s32.totalorder %s26, 2
      %p149 = por %p147, %p148
      %p150 = scmp.ne.s32.totalorder %s141, %s142
      %p151 = scmp.eq.s32.totalorder %s26, 0
      %p152 = por %p150, %p151
      %p153 = scmp.ne.s32.totalorder %s141, %s142
      %p154 = scmp.eq.s32.totalorder %s27, 2
      %p155 = por %p153, %p154
      %p157 = scmp.ne.s32.totalorder %s142, %s156
      %p158 = scmp.eq.s32.totalorder %s27, 0
      %p159 = por %p157, %p158
      %s161 = sadd.s32 %s160, 1
      %p164 = scmp.eq.s32.totalorder %s21, 2
      %p165 = scmp.ne.s32.totalorder %s160, %s162
      %p166 = scmp.eq.s32.totalorder %s21, 0
      %p167 = por %p165, %p166
      %p168 = scmp.ne.s32.totalorder %s160, %s162
      %p169 = scmp.eq.s32.totalorder %s26, 2
      %p170 = por %p168, %p169
      %p171 = scmp.ne.s32.totalorder %s162, %s163
      %p172 = scmp.eq.s32.totalorder %s26, 0
      %p173 = por %p171, %p172
      %p174 = scmp.ne.s32.totalorder %s162, %s163
      %p175 = scmp.eq.s32.totalorder %s27, 2
      %p176 = por %p174, %p175
      %p178 = scmp.ne.s32.totalorder %s163, %s177
      %p179 = scmp.eq.s32.totalorder %s27, 0
      %p180 = por %p178, %p179
      %s181 = ssub.s32 %s21, %s28
      %p182 = scmp.eq.s32.totalorder %s181, 0
      %s184 = sadd.s32 %s183, 1
      %s185 = scalar_select %p182, %s183, %s184
      %p188 = pneg %p182
      %p189 = scmp.eq.s32.totalorder %s21, 2
      %p190 = por %p188, %p189
      %p191 = scmp.ne.s32.totalorder %s183, %s186
      %p192 = scmp.eq.s32.totalorder %s21, 0
      %p193 = por %p191, %p192
      %p194 = scmp.ne.s32.totalorder %s183, %s186
      %p195 = scmp.eq.s32.totalorder %s26, 2
      %p196 = por %p194, %p195
      %p197 = scmp.ne.s32.totalorder %s186, %s187
      %p198 = scmp.eq.s32.totalorder %s26, 0
      %p199 = por %p197, %p198
      %p200 = scmp.ne.s32.totalorder %s186, %s187
      %p201 = scmp.eq.s32.totalorder %s27, 2
      %p202 = por %p200, %p201
      %p204 = scmp.ne.s32.totalorder %s187, %s203
      %p205 = scmp.eq.s32.totalorder %s27, 0
      %p206 = por %p204, %p205
      %p207 = scmp.le.s32.totalorder 1, %s21
      %p208 = scmp.lt.s32.totalorder %s21, 4
      %p209 = pnand %p207, %p208
      %p210 = pneg %p209
      // Predicated region
      $region9: #{tpu_custom_call.1} parent=5 // pred_check
        _
      $region10: #{tpu_custom_call.1} parent=5 // pred_check_branch
        %212 = sbr.rel (%p209) target = $region12
      $region11: #{tpu_custom_call.1} parent=5 // pred_region
        %s213 = ssub.s32 %s21, 1
        // Predicated region
        $region13: #{tpu_custom_call.1} parent=11 // pred_check
          %p214 = pneg %p68
        $region14: #{tpu_custom_call.1} parent=11 // pred_check_branch
          %216 = sbr.rel (%p214) target = $region16
        $region15: #{tpu_custom_call.1} parent=11 // pred_region
          %s218 = ssub.s32 1024, 1024
          %219 = vsyncadd [#allocation6], %s218
          %s220 = sshll.u32 [#allocation5], 4
          %s221 = int_to_ptr.vmem [resolvable:$true] %s220
          %226 = dma.hbm_to_vmem [thread:$0]  %s1, 1024, %s221, [#allocation6], 128, 128, 8
        $region16: #{tpu_custom_call.1} parent=11 // pred_fallthru
          _
        // Predicated region
        $region17: #{tpu_custom_call.1} parent=11 // pred_check
          %p227 = pneg %p89
        $region18: #{tpu_custom_call.1} parent=11 // pred_check_branch
          %229 = sbr.rel (%p227) target = $region20
        $region19: #{tpu_custom_call.1} parent=11 // pred_region
          _
        $region20: #{tpu_custom_call.1} parent=11 // pred_fallthru
          _
        // Predicated region
        $region21: #{tpu_custom_call.1} parent=11 // pred_check
          %p230 = pneg %p110
        $region22: #{tpu_custom_call.1} parent=11 // pred_check_branch
          %232 = sbr.rel (%p230) target = $region24
        $region23: #{tpu_custom_call.1} parent=11 // pred_region
          %s234 = ssub.s32 4096, 4096
          %235 = vsyncadd [#allocation6], %s234
          %s236 = sshll.u32 [#allocation7], 4
          %s237 = int_to_ptr.vmem [resolvable:$true] %s236
          %242 = dma.hbm_to_vmem [thread:$0]  %s3, 4096, %s237, [#allocation6], 128, 128, 8
        $region24: #{tpu_custom_call.1} parent=11 // pred_fallthru
          _
        // Predicated region
        $region25: #{tpu_custom_call.1} parent=11 // pred_check
          %p243 = pneg %p131
        $region26: #{tpu_custom_call.1} parent=11 // pred_check_branch
          %245 = sbr.rel (%p243) target = $region28
        $region27: #{tpu_custom_call.1} parent=11 // pred_region
          _
        $region28: #{tpu_custom_call.1} parent=11 // pred_fallthru
          _
        // Predicated region
        $region29: #{tpu_custom_call.1} parent=11 // pred_check
          %p246 = pneg %p152
        $region30: #{tpu_custom_call.1} parent=11 // pred_check_branch
          %248 = sbr.rel (%p246) target = $region32
        $region31: #{tpu_custom_call.1} parent=11 // pred_region
          %s250 = ssub.s32 2048, 2048
          %251 = vsyncadd [#allocation9], %s250
          %s252 = sshll.u32 [#allocation8], 4
          %s253 = int_to_ptr.vmem [resolvable:$true] %s252
          %258 = dma.hbm_to_vmem [thread:$0]  %s5, 2048, %s253, [#allocation9], 64, 64, 4
        $region32: #{tpu_custom_call.1} parent=11 // pred_fallthru
          _
        // Predicated region
        $region33: #{tpu_custom_call.1} parent=11 // pred_check
          %p259 = pneg %p173
        $region34: #{tpu_custom_call.1} parent=11 // pred_check_branch
          %261 = sbr.rel (%p259) target = $region36
        $region35: #{tpu_custom_call.1} parent=11 // pred_region
          _
        $region36: #{tpu_custom_call.1} parent=11 // pred_fallthru
          _
      $region12: #{tpu_custom_call.1} parent=5 // pred_fallthru
        _
      %p262 = scmp.lt.s32.totalorder %s21, 3
      // Predicated region
      $region37: #{tpu_custom_call.1} parent=5 // pred_check
        %p263 = pneg %p262
      $region38: #{tpu_custom_call.1} parent=5 // pred_check_branch
        %265 = sbr.rel (%p263) target = $region40
      $region39: #{tpu_custom_call.1} parent=5 // pred_region
        // Predicated region
        $region41: #{tpu_custom_call.1} parent=39 // pred_check
          %p266 = pneg %p41
        $region42: #{tpu_custom_call.1} parent=39 // pred_check_branch
          %268 = sbr.rel (%p266) target = $region44
        $region43: #{tpu_custom_call.1} parent=39 // pred_region
          %s269 = sand.u32 %s31, 1
          %s270 = scalar_lea.sflag [#allocation3], %s269
          %s271 = sand.u32 %s31, 1
          %s272 = smul.addr %s271, 4
          %s273 = scalar_lea.vmem [#allocation2], %s272
          %s275 = ssub.s32 64, 64
          %276 = vsyncadd %s270, %s275
          %s277 = smul.addr %s21, 64
          %s278 = scalar_lea.hbm %s0, %s277
          %s280 = sshll.u32 %s273, 4
          %s281 = int_to_ptr.vmem [resolvable:$true] %s280
          %283 = dma.hbm_to_vmem [thread:$0]  %s278, 64, %s281, %s270
        $region44: #{tpu_custom_call.1} parent=39 // pred_fallthru
          _
      $region40: #{tpu_custom_call.1} parent=5 // pred_fallthru
        _
      %p284 = scmp.le.s32.totalorder 1, %s21
      %p285 = scmp.lt.s32.totalorder %s21, 4
      %p286 = pnand %p284, %p285
      %p287 = pneg %p286
      // Predicated region
      $region45: #{tpu_custom_call.1} parent=5 // pred_check
        _
      $region46: #{tpu_custom_call.1} parent=5 // pred_check_branch
        %289 = sbr.rel (%p286) target = $region48
      $region47: #{tpu_custom_call.1} parent=5 // pred_region
        %s290 = ssub.s32 %s21, 1
        %s291 = sand.u32 %s34, 1
        %s292 = scalar_lea.sflag [#allocation3], %s291
        %s293 = sand.u32 %s34, 1
        %s294 = smul.addr %s293, 4
        %s295 = scalar_lea.vmem [#allocation2], %s294
        // Predicated region
        $region49: #{tpu_custom_call.1} parent=47 // pred_check
          %p296 = pneg %p47
        $region50: #{tpu_custom_call.1} parent=47 // pred_check_branch
          %298 = sbr.rel (%p296) target = $region52
        $region51: #{tpu_custom_call.1} parent=47 // pred_region
          %299 = dma.done %s292, 64
        $region52: #{tpu_custom_call.1} parent=47 // pred_fallthru
          _
        // Predicated region
        $region53: #{tpu_custom_call.1} parent=47 // pred_check
          %p300 = pneg %p68
        $region54: #{tpu_custom_call.1} parent=47 // pred_check_branch
          %302 = sbr.rel (%p300) target = $region56
        $region55: #{tpu_custom_call.1} parent=47 // pred_region
          %303 = dma.done [#allocation6], 1024
        $region56: #{tpu_custom_call.1} parent=47 // pred_fallthru
          _
        // Predicated region
        $region57: #{tpu_custom_call.1} parent=47 // pred_check
          %p304 = pneg %p110
        $region58: #{tpu_custom_call.1} parent=47 // pred_check_branch
          %306 = sbr.rel (%p304) target = $region60
        $region59: #{tpu_custom_call.1} parent=47 // pred_region
          %307 = dma.done [#allocation6], 4096
        $region60: #{tpu_custom_call.1} parent=47 // pred_fallthru
          _
        // Predicated region
        $region61: #{tpu_custom_call.1} parent=47 // pred_check
          %p308 = pneg %p152
        $region62: #{tpu_custom_call.1} parent=47 // pred_check_branch
          %310 = sbr.rel (%p308) target = $region64
        $region63: #{tpu_custom_call.1} parent=47 // pred_region
          %311 = dma.done [#allocation9], 2048
        $region64: #{tpu_custom_call.1} parent=47 // pred_fallthru
          _
        %s312 = sand.u32 %s34, 1
        %s313 = scalar_lea.sflag [#allocation3], %s312
        %s314 = sand.u32 %s34, 1
        %s315 = smul.addr %s314, 4
        %s316 = scalar_lea.vmem [#allocation2], %s315
        %p317 = pneg %p47
        %p318 = pneg %p44
        %p319 = pneg %p68
        %p320 = pneg %p65
        %p321 = pneg %p89
        %p322 = pneg %p86
        %p323 = pneg %p110
        %p324 = pneg %p107
        %p325 = pneg %p131
        %p326 = pneg %p128
        %p327 = pneg %p152
        %p328 = pneg %p149
        %p329 = pneg %p173
        %p330 = pneg %p170
        %p331 = pneg %p199
        %p332 = pneg %p196
        %s333 = sand.u32 %s186, 1
        %s334 = scalar_lea.sflag [#allocation4], %s333
        %s335 = sand.u32 %s186, 1
        %s336 = smul.addr %s335, 8
        %s337 = scalar_lea.vmem [#allocation10], %s336
        %v339 = vld [vmem:[%s295] sm:$0xf]
        %v340 = vld [vmem:[#allocation5] sm:$0xff]
        %v341 = vld [vmem:[#allocation5 + $0x8] sm:$0xff]
        %v342 = vld [vmem:[#allocation5 + $0x10] sm:$0xff]
        %v343 = vld [vmem:[#allocation5 + $0x18] sm:$0xff]
        %v344 = vld [vmem:[#allocation5 + $0x20] sm:$0xff]
        %v345 = vld [vmem:[#allocation5 + $0x28] sm:$0xff]
        %v346 = vld [vmem:[#allocation5 + $0x30] sm:$0xff]
        %v347 = vld [vmem:[#allocation5 + $0x38] sm:$0xff]
        %v348 = vld [vmem:[%s2] sm:$0x3]
        %v350 = vlaneseq
        %v351 = vshrl.u32 %v350, 7
        %v352 = vsub.s32 0, %v351
        %v353 = vrot.slane %v348, %v352
        %v354 = vlaneseq
        %v355 = vshrl.u32 %v354, 7
        %v356 = vsub.s32 1, %v355
        %v357 = vrot.slane %v348, %v356
        %v368 = vunpack.c.l.b16 %v340
        %v369 = vunpack.c.h.b16 %v340
        %v370 = vunpack.c.l.b16 %v341
        %v371 = vunpack.c.h.b16 %v341
        %v372 = vunpack.c.l.b16 %v342
        %v373 = vunpack.c.h.b16 %v342
        %v374 = vunpack.c.l.b16 %v343
        %v375 = vunpack.c.h.b16 %v343
        %v376 = vunpack.c.l.b16 %v344
        %v377 = vunpack.c.h.b16 %v344
        %v378 = vunpack.c.l.b16 %v345
        %v379 = vunpack.c.h.b16 %v345
        %v380 = vunpack.c.l.b16 %v346
        %v381 = vunpack.c.h.b16 %v346
        %v382 = vunpack.c.l.b16 %v347
        %v383 = vunpack.c.h.b16 %v347
        %v384 = vpack.c.b16 %v370, %v368
        %v385 = vpack.c.b16 %v371, %v369
        %v386 = vpack.c.b16 %v374, %v372
        %v387 = vpack.c.b16 %v375, %v373
        %v388 = vpack.c.b16 %v378, %v376
        %v389 = vpack.c.b16 %v379, %v377
        %v390 = vpack.c.b16 %v382, %v380
        %v391 = vpack.c.b16 %v383, %v381
        %vm400 = vcmask 523264
        %v402 = vsel %vm400, %v339, 0
        %404 = vmatprep.subr.bf16.mxu0 %v385
        %405 = vmatpush1.bf16.msra.mxu0 %v384
        %406 = vmatprep.subr.bf16.mxu0 %v387
        %407 = vmatpush1.bf16.msra.mxu0 %v386
        %408 = vmatprep.subr.bf16.mxu0 %v389
        %409 = vmatpush1.bf16.msra.mxu0 %v388
        %410 = vmatprep.subr.bf16.mxu0 %v391
        %411 = vmatpush1.bf16.msra.mxu0 %v390
        %412 = vmatprep.subr.bf16.mxu0 0
        %413 = vmatpush1.bf16.msra.mxu0 0
        %414 = vmatprep.subr.bf16.mxu0 0
        %415 = vmatpush1.bf16.msra.mxu0 0
        %416 = vmatprep.subr.bf16.mxu0 0
        %417 = vmatpush1.bf16.msra.mxu0 0
        %418 = vmatprep.subr.bf16.mxu0 0
        %419 = vmatpush1.bf16.msra.mxu0 0
        %420 = vmatprep.subr.bf16.mxu0 0
        %421 = vmatpush1.bf16.msra.mxu0 0
        %422 = vmatprep.subr.bf16.mxu0 0
        %423 = vmatpush1.bf16.msra.mxu0 0
        %424 = vmatprep.subr.bf16.mxu0 0
        %425 = vmatpush1.bf16.msra.mxu0 0
        %426 = vmatprep.subr.bf16.mxu0 0
        %427 = vmatpush1.bf16.msra.mxu0 0
        %428 = vmatprep.subr.bf16.mxu0 0
        %429 = vmatpush1.bf16.msra.mxu0 0
        %430 = vmatprep.subr.bf16.mxu0 0
        %431 = vmatpush1.bf16.msra.mxu0 0
        %432 = vmatprep.subr.bf16.mxu0 0
        %433 = vmatpush1.bf16.msra.mxu0 0
        %434 = vmatprep.subr.bf16.mxu0 0
        %435 = vmatpush1.bf16.msra.mxu0 0
        %436 = vmatprep.mubr.bf16.mxu0 0
        %437 = vmatmul.mubr.bf16.gmra.mrb[0].mxu0 %v402
        %v438 = vpop.f32.mrb[0].mxu0
        %v439 = vadd.f32 %v353, %v438
        %v440 = vpop.f32.mrb[0].mxu0
        %v441 = vadd.f32 %v357, %v440
        %v442 = vpop.f32.mrb[0].mxu0
        %v443 = vpop.f32.mrb[0].mxu0
        %444 = vdwg.mxu0
        %v445 = vmax.f32 %v439, 0.0
        %v446 = vmax.f32 %v441, 0.0
        %v447 = vpack.c.bf16 %v445, %v445
        %v448 = vpack.c.bf16 %v446, %v446
        %v449 = vld [vmem:[#allocation7] sm:$0xff]
        %v450 = vld [vmem:[#allocation7 + $0x8] sm:$0xff]
        %v451 = vld [vmem:[#allocation7 + $0x10] sm:$0xff]
        %v452 = vld [vmem:[#allocation7 + $0x18] sm:$0xff]
        %v453 = vld [vmem:[#allocation7 + $0x20] sm:$0xff]
        %v454 = vld [vmem:[#allocation7 + $0x28] sm:$0xff]
        %v455 = vld [vmem:[#allocation7 + $0x30] sm:$0xff]
        %v456 = vld [vmem:[#allocation7 + $0x38] sm:$0xff]
        %v457 = vld [vmem:[#allocation7 + $0x40] sm:$0xff]
        %v458 = vld [vmem:[#allocation7 + $0x48] sm:$0xff]
        %v459 = vld [vmem:[#allocation7 + $0x50] sm:$0xff]
        %v460 = vld [vmem:[#allocation7 + $0x58] sm:$0xff]
        %v461 = vld [vmem:[#allocation7 + $0x60] sm:$0xff]
        %v462 = vld [vmem:[#allocation7 + $0x68] sm:$0xff]
        %v463 = vld [vmem:[#allocation7 + $0x70] sm:$0xff]
        %v464 = vld [vmem:[#allocation7 + $0x78] sm:$0xff]
        %v465 = vld [vmem:[#allocation7 + $0x80] sm:$0xff]
        %v466 = vld [vmem:[#allocation7 + $0x88] sm:$0xff]
        %v467 = vld [vmem:[#allocation7 + $0x90] sm:$0xff]
        %v468 = vld [vmem:[#allocation7 + $0x98] sm:$0xff]
        %v469 = vld [vmem:[#allocation7 + $0xa0] sm:$0xff]
        %v470 = vld [vmem:[#allocation7 + $0xa8] sm:$0xff]
        %v471 = vld [vmem:[#allocation7 + $0xb0] sm:$0xff]
        %v472 = vld [vmem:[#allocation7 + $0xb8] sm:$0xff]
        %v473 = vld [vmem:[#allocation7 + $0xc0] sm:$0xff]
        %v474 = vld [vmem:[#allocation7 + $0xc8] sm:$0xff]
        %v475 = vld [vmem:[#allocation7 + $0xd0] sm:$0xff]
        %v476 = vld [vmem:[#allocation7 + $0xd8] sm:$0xff]
        %v477 = vld [vmem:[#allocation7 + $0xe0] sm:$0xff]
        %v478 = vld [vmem:[#allocation7 + $0xe8] sm:$0xff]
        %v479 = vld [vmem:[#allocation7 + $0xf0] sm:$0xff]
        %v480 = vld [vmem:[#allocation7 + $0xf8] sm:$0xff]
        %v481 = vld [vmem:[%s4] sm:$0x3]
        %v483 = vlaneseq
        %v484 = vshrl.u32 %v483, 7
        %v485 = vsub.s32 0, %v484
        %v486 = vrot.slane %v481, %v485
        %v487 = vlaneseq
        %v488 = vshrl.u32 %v487, 7
        %v489 = vsub.s32 1, %v488
        %v490 = vrot.slane %v481, %v489
        %v525 = vunpack.c.l.b16 %v449
        %v526 = vunpack.c.h.b16 %v449
        %v527 = vunpack.c.l.b16 %v450
        %v528 = vunpack.c.h.b16 %v450
        %v529 = vunpack.c.l.b16 %v451
        %v530 = vunpack.c.h.b16 %v451
        %v531 = vunpack.c.l.b16 %v452
        %v532 = vunpack.c.h.b16 %v452
        %v533 = vunpack.c.l.b16 %v453
        %v534 = vunpack.c.h.b16 %v453
        %v535 = vunpack.c.l.b16 %v454
        %v536 = vunpack.c.h.b16 %v454
        %v537 = vunpack.c.l.b16 %v455
        %v538 = vunpack.c.h.b16 %v455
        %v539 = vunpack.c.l.b16 %v456
        %v540 = vunpack.c.h.b16 %v456
        %v541 = vunpack.c.l.b16 %v457
        %v542 = vunpack.c.h.b16 %v457
        %v543 = vunpack.c.l.b16 %v458
        %v544 = vunpack.c.h.b16 %v458
        %v545 = vunpack.c.l.b16 %v459
        %v546 = vunpack.c.h.b16 %v459
        %v547 = vunpack.c.l.b16 %v460
        %v548 = vunpack.c.h.b16 %v460
        %v549 = vunpack.c.l.b16 %v461
        %v550 = vunpack.c.h.b16 %v461
        %v551 = vunpack.c.l.b16 %v462
        %v552 = vunpack.c.h.b16 %v462
        %v553 = vunpack.c.l.b16 %v463
        %v554 = vunpack.c.h.b16 %v463
        %v555 = vunpack.c.l.b16 %v464
        %v556 = vunpack.c.h.b16 %v464
        %v557 = vunpack.c.l.b16 %v465
        %v558 = vunpack.c.h.b16 %v465
        %v559 = vunpack.c.l.b16 %v466
        %v560 = vunpack.c.h.b16 %v466
        %v561 = vunpack.c.l.b16 %v467
        %v562 = vunpack.c.h.b16 %v467
        %v563 = vunpack.c.l.b16 %v468
        %v564 = vunpack.c.h.b16 %v468
        %v565 = vunpack.c.l.b16 %v469
        %v566 = vunpack.c.h.b16 %v469
        %v567 = vunpack.c.l.b16 %v470
        %v568 = vunpack.c.h.b16 %v470
        %v569 = vunpack.c.l.b16 %v471
        %v570 = vunpack.c.h.b16 %v471
        %v571 = vunpack.c.l.b16 %v472
        %v572 = vunpack.c.h.b16 %v472
        %v573 = vunpack.c.l.b16 %v473
        %v574 = vunpack.c.h.b16 %v473
        %v575 = vunpack.c.l.b16 %v474
        %v576 = vunpack.c.h.b16 %v474
        %v577 = vunpack.c.l.b16 %v475
        %v578 = vunpack.c.h.b16 %v475
        %v579 = vunpack.c.l.b16 %v476
        %v580 = vunpack.c.h.b16 %v476
        %v581 = vunpack.c.l.b16 %v477
        %v582 = vunpack.c.h.b16 %v477
        %v583 = vunpack.c.l.b16 %v478
        %v584 = vunpack.c.h.b16 %v478
        %v585 = vunpack.c.l.b16 %v479
        %v586 = vunpack.c.h.b16 %v479
        %v587 = vunpack.c.l.b16 %v480
        %v588 = vunpack.c.h.b16 %v480
        %v589 = vpack.c.b16 %v527, %v525
        %v590 = vpack.c.b16 %v528, %v526
        %v591 = vpack.c.b16 %v531, %v529
        %v592 = vpack.c.b16 %v532, %v530
        %v593 = vpack.c.b16 %v535, %v533
        %v594 = vpack.c.b16 %v536, %v534
        %v595 = vpack.c.b16 %v539, %v537
        %v596 = vpack.c.b16 %v540, %v538
        %v597 = vpack.c.b16 %v543, %v541
        %v598 = vpack.c.b16 %v544, %v542
        %v599 = vpack.c.b16 %v547, %v545
        %v600 = vpack.c.b16 %v548, %v546
        %v601 = vpack.c.b16 %v551, %v549
        %v602 = vpack.c.b16 %v552, %v550
        %v603 = vpack.c.b16 %v555, %v553
        %v604 = vpack.c.b16 %v556, %v554
        %v605 = vpack.c.b16 %v559, %v557
        %v606 = vpack.c.b16 %v560, %v558
        %v607 = vpack.c.b16 %v563, %v561
        %v608 = vpack.c.b16 %v564, %v562
        %v609 = vpack.c.b16 %v567, %v565
        %v610 = vpack.c.b16 %v568, %v566
        %v611 = vpack.c.b16 %v571, %v569
        %v612 = vpack.c.b16 %v572, %v570
        %v613 = vpack.c.b16 %v575, %v573
        %v614 = vpack.c.b16 %v576, %v574
        %v615 = vpack.c.b16 %v579, %v577
        %v616 = vpack.c.b16 %v580, %v578
        %v617 = vpack.c.b16 %v583, %v581
        %v618 = vpack.c.b16 %v584, %v582
        %v619 = vpack.c.b16 %v587, %v585
        %v620 = vpack.c.b16 %v588, %v586
        %653 = vmatprep.subr.bf16.mxu0 %v590
        %654 = vmatpush1.bf16.msra.mxu0 %v589
        %655 = vmatprep.subr.bf16.mxu0 %v592
        %656 = vmatpush1.bf16.msra.mxu0 %v591
        %657 = vmatprep.subr.bf16.mxu0 %v594
        %658 = vmatpush1.bf16.msra.mxu0 %v593
        %659 = vmatprep.subr.bf16.mxu0 %v596
        %660 = vmatpush1.bf16.msra.mxu0 %v595
        %661 = vmatprep.subr.bf16.mxu0 %v598
        %662 = vmatpush1.bf16.msra.mxu0 %v597
        %663 = vmatprep.subr.bf16.mxu0 %v600
        %664 = vmatpush1.bf16.msra.mxu0 %v599
        %665 = vmatprep.subr.bf16.mxu0 %v602
        %666 = vmatpush1.bf16.msra.mxu0 %v601
        %667 = vmatprep.subr.bf16.mxu0 %v604
        %668 = vmatpush1.bf16.msra.mxu0 %v603
        %669 = vmatprep.subr.bf16.mxu0 %v606
        %670 = vmatpush1.bf16.msra.mxu0 %v605
        %671 = vmatprep.subr.bf16.mxu0 %v608
        %672 = vmatpush1.bf16.msra.mxu0 %v607
        %673 = vmatprep.subr.bf16.mxu0 %v610
        %674 = vmatpush1.bf16.msra.mxu0 %v609
        %675 = vmatprep.subr.bf16.mxu0 %v612
        %676 = vmatpush1.bf16.msra.mxu0 %v611
        %677 = vmatprep.subr.bf16.mxu0 %v614
        %678 = vmatpush1.bf16.msra.mxu0 %v613
        %679 = vmatprep.subr.bf16.mxu0 %v616
        %680 = vmatpush1.bf16.msra.mxu0 %v615
        %681 = vmatprep.subr.bf16.mxu0 %v618
        %682 = vmatpush1.bf16.msra.mxu0 %v617
        %683 = vmatprep.subr.bf16.mxu0 %v620
        %684 = vmatpush1.bf16.msra.mxu0 %v619
        %685 = vmatprep.mubr.bf16.mxu0 %v448
        %686 = vmatmul.mubr.bf16.gmra.mrb[0].mxu0 %v447
        %v687 = vpop.f32.mrb[0].mxu0
        %v688 = vadd.f32 %v486, %v687
        %v689 = vpop.f32.mrb[0].mxu0
        %v690 = vadd.f32 %v490, %v689
        %v691 = vpop.f32.mrb[0].mxu0
        %v692 = vpop.f32.mrb[0].mxu0
        %693 = vdwg.mxu0
        %v694 = vmax.f32 %v688, 0.0
        %v695 = vmax.f32 %v690, 0.0
        %v696 = vpack.c.bf16 %v694, %v694
        %v697 = vpack.c.bf16 %v695, %v695
        %v698 = vld [vmem:[#allocation8] sm:$0xf]
        %v699 = vld [vmem:[#allocation8 + $0x4] sm:$0xf]
        %v700 = vld [vmem:[#allocation8 + $0x8] sm:$0xf]
        %v701 = vld [vmem:[#allocation8 + $0xc] sm:$0xf]
        %v702 = vld [vmem:[#allocation8 + $0x10] sm:$0xf]
        %v703 = vld [vmem:[#allocation8 + $0x14] sm:$0xf]
        %v704 = vld [vmem:[#allocation8 + $0x18] sm:$0xf]
        %v705 = vld [vmem:[#allocation8 + $0x1c] sm:$0xf]
        %v706 = vld [vmem:[#allocation8 + $0x20] sm:$0xf]
        %v707 = vld [vmem:[#allocation8 + $0x24] sm:$0xf]
        %v708 = vld [vmem:[#allocation8 + $0x28] sm:$0xf]
        %v709 = vld [vmem:[#allocation8 + $0x2c] sm:$0xf]
        %v710 = vld [vmem:[#allocation8 + $0x30] sm:$0xf]
        %v711 = vld [vmem:[#allocation8 + $0x34] sm:$0xf]
        %v712 = vld [vmem:[#allocation8 + $0x38] sm:$0xf]
        %v713 = vld [vmem:[#allocation8 + $0x3c] sm:$0xf]
        %v714 = vld [vmem:[#allocation8 + $0x40] sm:$0xf]
        %v715 = vld [vmem:[#allocation8 + $0x44] sm:$0xf]
        %v716 = vld [vmem:[#allocation8 + $0x48] sm:$0xf]
        %v717 = vld [vmem:[#allocation8 + $0x4c] sm:$0xf]
        %v718 = vld [vmem:[#allocation8 + $0x50] sm:$0xf]
        %v719 = vld [vmem:[#allocation8 + $0x54] sm:$0xf]
        %v720 = vld [vmem:[#allocation8 + $0x58] sm:$0xf]
        %v721 = vld [vmem:[#allocation8 + $0x5c] sm:$0xf]
        %v722 = vld [vmem:[#allocation8 + $0x60] sm:$0xf]
        %v723 = vld [vmem:[#allocation8 + $0x64] sm:$0xf]
        %v724 = vld [vmem:[#allocation8 + $0x68] sm:$0xf]
        %v725 = vld [vmem:[#allocation8 + $0x6c] sm:$0xf]
        %v726 = vld [vmem:[#allocation8 + $0x70] sm:$0xf]
        %v727 = vld [vmem:[#allocation8 + $0x74] sm:$0xf]
        %v728 = vld [vmem:[#allocation8 + $0x78] sm:$0xf]
        %v729 = vld [vmem:[#allocation8 + $0x7c] sm:$0xf]
        %v730 = vld [vmem:[%s6] sm:$0x1]
        %v732 = vlaneseq
        %v733 = vshrl.u32 %v732, 7
        %v734 = vsub.s32 0, %v733
        %v735 = vrot.slane %v730, %v734
        %v769 = vunpack.c.l.b16 %v698
        %v770 = vunpack.c.l.b16 %v699
        %v771 = vunpack.c.l.b16 %v700
        %v772 = vunpack.c.l.b16 %v701
        %v773 = vunpack.c.l.b16 %v702
        %v774 = vunpack.c.l.b16 %v703
        %v775 = vunpack.c.l.b16 %v704
        %v776 = vunpack.c.l.b16 %v705
        %v777 = vunpack.c.l.b16 %v706
        %v778 = vunpack.c.l.b16 %v707
        %v779 = vunpack.c.l.b16 %v708
        %v780 = vunpack.c.l.b16 %v709
        %v781 = vunpack.c.l.b16 %v710
        %v782 = vunpack.c.l.b16 %v711
        %v783 = vunpack.c.l.b16 %v712
        %v784 = vunpack.c.l.b16 %v713
        %v785 = vunpack.c.l.b16 %v714
        %v786 = vunpack.c.l.b16 %v715
        %v787 = vunpack.c.l.b16 %v716
        %v788 = vunpack.c.l.b16 %v717
        %v789 = vunpack.c.l.b16 %v718
        %v790 = vunpack.c.l.b16 %v719
        %v791 = vunpack.c.l.b16 %v720
        %v792 = vunpack.c.l.b16 %v721
        %v793 = vunpack.c.l.b16 %v722
        %v794 = vunpack.c.l.b16 %v723
        %v795 = vunpack.c.l.b16 %v724
        %v796 = vunpack.c.l.b16 %v725
        %v797 = vunpack.c.l.b16 %v726
        %v798 = vunpack.c.l.b16 %v727
        %v799 = vunpack.c.l.b16 %v728
        %v800 = vunpack.c.l.b16 %v729
        %v801 = vpack.c.b16 %v770, %v769
        %v802 = vpack.c.b16 %v772, %v771
        %v803 = vpack.c.b16 %v774, %v773
        %v804 = vpack.c.b16 %v776, %v775
        %v805 = vpack.c.b16 %v778, %v777
        %v806 = vpack.c.b16 %v780, %v779
        %v807 = vpack.c.b16 %v782, %v781
        %v808 = vpack.c.b16 %v784, %v783
        %v809 = vpack.c.b16 %v786, %v785
        %v810 = vpack.c.b16 %v788, %v787
        %v811 = vpack.c.b16 %v790, %v789
        %v812 = vpack.c.b16 %v792, %v791
        %v813 = vpack.c.b16 %v794, %v793
        %v814 = vpack.c.b16 %v796, %v795
        %v815 = vpack.c.b16 %v798, %v797
        %v816 = vpack.c.b16 %v800, %v799
        %833 = vmatprep.subr.bf16.mxu0 0
        %834 = vmatpush1.bf16.msra.mxu0 %v801
        %835 = vmatprep.subr.bf16.mxu0 0
        %836 = vmatpush1.bf16.msra.mxu0 %v802
        %837 = vmatprep.subr.bf16.mxu0 0
        %838 = vmatpush1.bf16.msra.mxu0 %v803
        %839 = vmatprep.subr.bf16.mxu0 0
        %840 = vmatpush1.bf16.msra.mxu0 %v804
        %841 = vmatprep.subr.bf16.mxu0 0
        %842 = vmatpush1.bf16.msra.mxu0 %v805
        %843 = vmatprep.subr.bf16.mxu0 0
        %844 = vmatpush1.bf16.msra.mxu0 %v806
        %845 = vmatprep.subr.bf16.mxu0 0
        %846 = vmatpush1.bf16.msra.mxu0 %v807
        %847 = vmatprep.subr.bf16.mxu0 0
        %848 = vmatpush1.bf16.msra.mxu0 %v808
        %849 = vmatprep.subr.bf16.mxu0 0
        %850 = vmatpush1.bf16.msra.mxu0 %v809
        %851 = vmatprep.subr.bf16.mxu0 0
        %852 = vmatpush1.bf16.msra.mxu0 %v810
        %853 = vmatprep.subr.bf16.mxu0 0
        %854 = vmatpush1.bf16.msra.mxu0 %v811
        %855 = vmatprep.subr.bf16.mxu0 0
        %856 = vmatpush1.bf16.msra.mxu0 %v812
        %857 = vmatprep.subr.bf16.mxu0 0
        %858 = vmatpush1.bf16.msra.mxu0 %v813
        %859 = vmatprep.subr.bf16.mxu0 0
        %860 = vmatpush1.bf16.msra.mxu0 %v814
        %861 = vmatprep.subr.bf16.mxu0 0
        %862 = vmatpush1.bf16.msra.mxu0 %v815
        %863 = vmatprep.subr.bf16.mxu0 0
        %864 = vmatpush1.bf16.msra.mxu0 %v816
        %865 = vmatprep.mubr.bf16.mxu0 %v697
        %866 = vmatmul.mubr.bf16.gmra.mrb[0].mxu0 %v696
        %v867 = vpop.f32.mrb[0].mxu0
        %v868 = vadd.f32 %v735, %v867
        %v869 = vpop.f32.mrb[0].mxu0
        %v870 = vpop.f32.mrb[0].mxu0
        %v871 = vpop.f32.mrb[0].mxu0
        %872 = vdwg.mxu0
        %v873 = vmax.f32 %v868, 0.0
        %874 = vst [vmem:[%s337] sm:$0xff] %v873
        %s875 = sand.u32 %s186, 1
        %s876 = scalar_lea.sflag [#allocation4], %s875
        %s877 = sand.u32 %s186, 1
        %s878 = smul.addr %s877, 8
        %s879 = scalar_lea.vmem [#allocation10], %s878
        // Predicated region
        $region65: #{tpu_custom_call.1} parent=47 // pred_check
          %p880 = pneg %p196
        $region66: #{tpu_custom_call.1} parent=47 // pred_check_branch
          %882 = sbr.rel (%p880) target = $region68
        $region67: #{tpu_custom_call.1} parent=47 // pred_region
          %s884 = ssub.s32 128, 128
          %885 = vsyncadd %s876, %s884
          %s886 = smul.addr %s26, 128
          %s887 = scalar_lea.hbm %s7, %s886
          %s889 = sshll.u32 %s879, 4
          %s890 = int_to_ptr.vmem [resolvable:$true] %s889
          %892 = dma.vmem_to_hbm [thread:$0]  %s890, 128, %s887, %s876
        $region68: #{tpu_custom_call.1} parent=47 // pred_fallthru
          _
      $region48: #{tpu_custom_call.1} parent=5 // pred_fallthru
        _
      %p893 = scmp.le.s32.totalorder 2, %s21
      // Predicated region
      $region69: #{tpu_custom_call.1} parent=5 // pred_check
        %p894 = pneg %p893
      $region70: #{tpu_custom_call.1} parent=5 // pred_check_branch
        %896 = sbr.rel (%p894) target = $region72
      $region71: #{tpu_custom_call.1} parent=5 // pred_region
        %s897 = ssub.s32 %s21, 2
        // Predicated region
        $region73: #{tpu_custom_call.1} parent=71 // pred_check
          %p898 = pneg %p202
        $region74: #{tpu_custom_call.1} parent=71 // pred_check_branch
          %900 = sbr.rel (%p898) target = $region76
        $region75: #{tpu_custom_call.1} parent=71 // pred_region
          %s901 = sand.u32 %s187, 1
          %s902 = scalar_lea.sflag [#allocation4], %s901
          %s903 = sand.u32 %s187, 1
          %s904 = smul.addr %s903, 8
          %s905 = scalar_lea.vmem [#allocation10], %s904
          %906 = dma.done %s902, 128
        $region76: #{tpu_custom_call.1} parent=71 // pred_fallthru
          _
      $region72: #{tpu_custom_call.1} parent=5 // pred_fallthru
        _
    $region6: #{tpu_custom_call.1} parent=1 // loop_footer
      %s25 = sadd.s32 1, %s21
    $region7: #{tpu_custom_call.1} parent=1 // loop_footer_branch
      %20 = sbr.rel target = $region3
    $region8: #{tpu_custom_call.1} parent=1 // loop_exit
      _
    %907 = vsyncpa [#allocation3], 1
    %s908 = scalar_lea.sflag [#allocation3], 1
    %909 = vsyncpa %s908, 1
    %910 = vsyncpa [#allocation6], 1
    %911 = vsyncpa [#allocation9], 1
    %912 = vsyncpa [#allocation4], 1
    %s913 = scalar_lea.sflag [#allocation4], 1
    %914 = vsyncpa %s913, 1

</llo_original>
